<compile_context>
chip_gen: v5e
topology: v5e:2x2
jax: 0.10.0
libtpu: 0.0.40
codegen_flags: <defaults>
</compile_context>

<pallas_src>
import jax
import jax.numpy as jnp
from jax.experimental import pallas as pl
from jax.experimental.pallas import tpu as pltpu

HID = 64       # fc_state / fc_action output width
HID2 = 128     # fc1 width (concatenated hidden)
TILE_B_DEFAULT = 4096


def sac_critic_kernel(state_ref, action_ref, ws_ref, wa_ref, w1_ref,
                      consts_ref, b2_ref, out_ref):
    # Stage 1: fused fc_state + fc_action + ReLU.  Each weight slice is
    # zero-padded to the full 128-wide hidden, so the two partial products
    # combine with a cheap VPU add (no lane concat).
    h1 = jnp.dot(state_ref[...], ws_ref[...], preferred_element_type=jnp.float32)
    h1 = h1 + jnp.dot(action_ref[...], wa_ref[...],
                      preferred_element_type=jnp.float32)
    h1 = jnp.maximum(h1 + consts_ref[0:1, :], 0.0)            # (tb, 128) f32

    # Stage 2: fc1 (128x128) + ReLU.  bf16 operands, f32 accumulation.
    h2 = jnp.dot(h1.astype(jnp.bfloat16), w1_ref[...],
                 preferred_element_type=jnp.float32)
    h2 = jnp.maximum(h2 + consts_ref[1:2, :], 0.0)             # (tb, 128) f32

    # Stage 3: fc2 (out_features=1) as VPU multiply + XLU lane reduce; the
    # scalar bias comes from SMEM.
    q = jnp.sum(h2 * consts_ref[2:3, :], axis=-1, keepdims=True) + b2_ref[0, 0]
    out_ref[...] = q


def _choose_tile(B, tile_b):
    """Batch tile: multiple of 8, capped at tile_b, and <= ceil(B/2) so the
    parallel grid has >= 2 steps (keeps both v7x TensorCores busy)."""
    if B <= 8:
        return B                      # block equals full batch dim
    half = -(-B // 2)                 # ceil(B / 2)
    half = -(-half // 8) * 8          # round up to sublane multiple of 8
    return max(8, min(tile_b, half))


def sac_critic_forward(state, action, packed_params, tile_b=TILE_B_DEFAULT):
    ws, wa, w1t, consts, b2_smem = packed_params
    B, state_dim = state.shape
    action_dim = action.shape[1]

    # bf16 activations: halves input DMA bytes, native MXU rate.
    state_bf = state.astype(jnp.bfloat16)
    action_bf = action.astype(jnp.bfloat16)

    tb = _choose_tile(B, tile_b)
    grid = (pl.cdiv(B, tb),)

    cp_kwargs = dict(dimension_semantics=("parallel",))
    if tb >= 8192:
        # Only needed if a caller pushes tiles past v5e's 16 MiB scoped default.
        cp_kwargs["vmem_limit_bytes"] = 64 * 1024 * 1024

    out = pl.pallas_call(
        sac_critic_kernel,
        out_shape=jax.ShapeDtypeStruct((B, 1), jnp.float32),
        grid=grid,
        in_specs=[
            pl.BlockSpec((tb, state_dim), lambda i: (i, 0)),     # state (tiled)
            pl.BlockSpec((tb, action_dim), lambda i: (i, 0)),    # action (tiled)
            pl.BlockSpec((state_dim, HID2), lambda i: (0, 0)),   # fc_state W^T (padded)
            pl.BlockSpec((action_dim, HID2), lambda i: (0, 0)),  # fc_action W^T (padded)
            pl.BlockSpec((HID2, HID2), lambda i: (0, 0)),        # fc1 W^T
            pl.BlockSpec((8, HID2), lambda i: (0, 0)),           # packed f32 constants
            pl.BlockSpec(memory_space=pltpu.MemorySpace.SMEM),   # fc2 bias scalar
        ],
        out_specs=pl.BlockSpec((tb, 1), lambda i: (i, 0)),
        compiler_params=pltpu.CompilerParams(**cp_kwargs),
    )(state_bf, action_bf, ws, wa, w1t, consts, b2_smem)

    return out


def make_params(key, state_dim, action_dim):
    """Synthetic PyTorch-layout params: W is (out_features, in_features), b is (out,)."""
    ks = jax.random.split(key, 8)
    Ws = jax.random.normal(ks[0], (HID, state_dim), jnp.float32) * 0.1
    bs = jax.random.normal(ks[1], (HID,), jnp.float32) * 0.1
    Wa = jax.random.normal(ks[2], (HID, action_dim), jnp.float32) * 0.1
    ba = jax.random.normal(ks[3], (HID,), jnp.float32) * 0.1
    W1 = jax.random.normal(ks[4], (HID2, HID2), jnp.float32) * 0.1
    b1 = jax.random.normal(ks[5], (HID2,), jnp.float32) * 0.1
    W2 = jax.random.normal(ks[6], (1, HID2), jnp.float32) * 0.1
    b2 = jax.random.normal(ks[7], (1,), jnp.float32) * 0.1
    return Ws, bs, Wa, ba, W1, b1, W2, b2


def pack_params(torch_params, state_dim, action_dim):
    """Pack PyTorch-layout params into the kernel layout (done once, offline)."""
    Ws, bs, Wa, ba, W1, b1, W2, b2 = torch_params
    # Stage-1 weights, pre-transposed to (in, out) and zero-padded to the full
    # 128-wide hidden so the two partial products combine with a VPU add.
    ws = jnp.zeros((state_dim, HID2), jnp.float32).at[:, :HID].set(Ws.T)
    wa = jnp.zeros((action_dim, HID2), jnp.float32).at[:, HID:].set(Wa.T)
    ws = ws.astype(jnp.bfloat16)
    wa = wa.astype(jnp.bfloat16)
    w1t = W1.T.astype(jnp.bfloat16)                       # (128, 128)
    # Small f32 constants packed into a single (8,128) VMEM block:
    #   row 0 = [bs | ba], row 1 = b1, row 2 = fc2 weight row.
    consts = jnp.zeros((8, HID2), jnp.float32)
    consts = consts.at[0, :HID].set(bs).at[0, HID:].set(ba)
    consts = consts.at[1, :].set(b1)
    consts = consts.at[2, :].set(W2.reshape(HID2))
    b2_smem = b2.reshape(1, 1).astype(jnp.float32)        # scalar in SMEM
    return ws, wa, w1t, consts, b2_smem


def reference_forward(state, action, torch_params):
    """Pure-JAX f32 mirror of the PyTorch SACCritic.forward."""
    Ws, bs, Wa, ba, W1, b1, W2, b2 = torch_params
    xs = jnp.maximum(state @ Ws.T + bs, 0.0)
    xa = jnp.maximum(action @ Wa.T + ba, 0.0)
    x = jnp.concatenate([xs, xa], axis=1)
    h = jnp.maximum(x @ W1.T + b1, 0.0)
    return h @ W2.T + b2


if __name__ == "__main__":
    key = jax.random.PRNGKey(0)
    k_s1, k_a1, k_params, k_s2, k_a2 = jax.random.split(key, 5)

    state_dim, action_dim = 16, 8
    torch_params = make_params(k_params, state_dim, action_dim)
    packed = pack_params(torch_params, state_dim, action_dim)

    # Test 1: tiny batch, single grid step.
    B1 = 8
    state1 = jax.random.normal(k_s1, (B1, state_dim), jnp.float32)
    action1 = jax.random.normal(k_a1, (B1, action_dim), jnp.float32)
    q1 = jax.block_until_ready(sac_critic_forward(state1, action1, packed))
    q1_ref = reference_forward(state1, action1, torch_params)
    assert q1.shape == (B1, 1)
    # bf16 operands -> relaxed tolerance vs the f32 reference.
    assert float(jnp.max(jnp.abs(q1 - q1_ref))) < 5e-2, "mismatch vs reference (test 1)"

    # Test 2: ragged batch, multi-step parallel grid (exercises partial blocks).
    B2 = 50
    state2 = jax.random.normal(k_s2, (B2, state_dim), jnp.float32)
    action2 = jax.random.normal(k_a2, (B2, action_dim), jnp.float32)
    q2 = jax.block_until_ready(sac_critic_forward(state2, action2, packed))
    q2_ref = reference_forward(state2, action2, torch_params)
    assert q2.shape == (B2, 1)
    assert float(jnp.max(jnp.abs(q2 - q2_ref))) < 5e-2, "mismatch vs reference (test 2)"

    print("KERNEL_OK")
</pallas_src>

<mosaic_0001>
module attributes {stable_mosaic.version = 11 : i64} {
  func.func @sac_critic_kernel(%arg0: i32, %arg1: memref<8x16xbf16, #tpu.memory_space<vmem>>, %arg2: memref<8x8xbf16, #tpu.memory_space<vmem>>, %arg3: memref<16x128xbf16, #tpu.memory_space<vmem>>, %arg4: memref<8x128xbf16, #tpu.memory_space<vmem>>, %arg5: memref<128x128xbf16, #tpu.memory_space<vmem>>, %arg6: memref<8x128xf32, #tpu.memory_space<vmem>>, %arg7: memref<1x1xf32, #tpu.memory_space<smem>>, %arg8: memref<8x1xf32, #tpu.memory_space<vmem>>) attributes {dimension_semantics = [#tpu.dimension_semantics<parallel>], iteration_bounds = array<i64: 1>, scalar_prefetch = 0 : i64, scratch_operands = 0 : i64, tpu.core_type = #tpu.core_type<tc>, window_params = [{transform_indices = @transform_0, window_bounds = array<i64: 8, 16>}, {transform_indices = @transform_1, window_bounds = array<i64: 8, 8>}, {pipeline_mode = #tpu.pipeline_mode<synchronous>, transform_indices = @transform_2, window_bounds = array<i64: 16, 128>}, {pipeline_mode = #tpu.pipeline_mode<synchronous>, transform_indices = @transform_3, window_bounds = array<i64: 8, 128>}, {pipeline_mode = #tpu.pipeline_mode<synchronous>, transform_indices = @transform_4, window_bounds = array<i64: 128, 128>}, {pipeline_mode = #tpu.pipeline_mode<synchronous>, transform_indices = @transform_5, window_bounds = array<i64: 8, 128>}, {transform_indices = @transform_6, window_bounds = array<i64: 1, 1>}, {transform_indices = @transform_7, window_bounds = array<i64: 8, 1>}]} {
    %c0 = arith.constant 0 : index
    %c0_0 = arith.constant 0 : index
    %0 = vector.load %arg1[%c0, %c0_0] : memref<8x16xbf16, #tpu.memory_space<vmem>>, vector<8x16xbf16>
    %c0_1 = arith.constant 0 : index
    %c0_2 = arith.constant 0 : index
    %1 = vector.load %arg3[%c0_1, %c0_2] : memref<16x128xbf16, #tpu.memory_space<vmem>>, vector<16x128xbf16>
    %cst = arith.constant dense<0.000000e+00> : vector<8x128xf32>
    %2 = tpu.matmul %0, %1, %cst {dimension_numbers = #tpu.dot_dimension_numbers<[1], [0], [0], [1], [0, 0, 1, 1], [], []>} : vector<8x16xbf16>, vector<16x128xbf16>, vector<8x128xf32> -> vector<8x128xf32>
    %c0_3 = arith.constant 0 : index
    %c0_4 = arith.constant 0 : index
    %3 = vector.load %arg2[%c0_3, %c0_4] : memref<8x8xbf16, #tpu.memory_space<vmem>>, vector<8x8xbf16>
    %c0_5 = arith.constant 0 : index
    %c0_6 = arith.constant 0 : index
    %4 = vector.load %arg4[%c0_5, %c0_6] : memref<8x128xbf16, #tpu.memory_space<vmem>>, vector<8x128xbf16>
    %cst_7 = arith.constant dense<0.000000e+00> : vector<8x128xf32>
    %5 = tpu.matmul %3, %4, %cst_7 {dimension_numbers = #tpu.dot_dimension_numbers<[1], [0], [0], [1], [0, 0, 1, 1], [], []>} : vector<8x8xbf16>, vector<8x128xbf16>, vector<8x128xf32> -> vector<8x128xf32>
    %6 = arith.addf %2, %5 : vector<8x128xf32>
    %c0_8 = arith.constant 0 : index
    %c0_9 = arith.constant 0 : index
    %7 = vector.load %arg6[%c0_8, %c0_9] : memref<8x128xf32, #tpu.memory_space<vmem>>, vector<1x128xf32>
    %8 = vector.broadcast %7 : vector<1x128xf32> to vector<8x128xf32>
    %9 = arith.addf %6, %8 : vector<8x128xf32>
    %cst_10 = arith.constant 0.000000e+00 : f32
    %10 = vector.broadcast %cst_10 : f32 to vector<8x128xf32>
    %11 = arith.maximumf %9, %10 : vector<8x128xf32>
    %12 = arith.truncf %11 : vector<8x128xf32> to vector<8x128xbf16>
    %c0_11 = arith.constant 0 : index
    %c0_12 = arith.constant 0 : index
    %13 = vector.load %arg5[%c0_11, %c0_12] : memref<128x128xbf16, #tpu.memory_space<vmem>>, vector<128x128xbf16>
    %cst_13 = arith.constant dense<0.000000e+00> : vector<8x128xf32>
    %14 = tpu.matmul %12, %13, %cst_13 {dimension_numbers = #tpu.dot_dimension_numbers<[1], [0], [0], [1], [0, 0, 1, 1], [], []>} : vector<8x128xbf16>, vector<128x128xbf16>, vector<8x128xf32> -> vector<8x128xf32>
    %c1 = arith.constant 1 : index
    %c0_14 = arith.constant 0 : index
    %15 = vector.load %arg6[%c1, %c0_14] : memref<8x128xf32, #tpu.memory_space<vmem>>, vector<1x128xf32>
    %16 = vector.broadcast %15 : vector<1x128xf32> to vector<8x128xf32>
    %17 = arith.addf %14, %16 : vector<8x128xf32>
    %cst_15 = arith.constant 0.000000e+00 : f32
    %18 = vector.broadcast %cst_15 : f32 to vector<8x128xf32>
    %19 = arith.maximumf %17, %18 : vector<8x128xf32>
    %c2 = arith.constant 2 : index
    %c0_16 = arith.constant 0 : index
    %20 = vector.load %arg6[%c2, %c0_16] : memref<8x128xf32, #tpu.memory_space<vmem>>, vector<1x128xf32>
    %21 = vector.broadcast %20 : vector<1x128xf32> to vector<8x128xf32>
    %22 = arith.mulf %19, %21 : vector<8x128xf32>
    %cst_17 = arith.constant dense<0.000000e+00> : vector<8xf32>
    %23 = vector.multi_reduction <add>, %22, %cst_17 [1] : vector<8x128xf32> to vector<8xf32>
    %24 = vector.shape_cast %23 : vector<8xf32> to vector<8x1xf32>
    %c0_18 = arith.constant 0 : index
    %c0_19 = arith.constant 0 : index
    %25 = memref.load %arg7[%c0_18, %c0_19] : memref<1x1xf32, #tpu.memory_space<smem>>
    %26 = vector.broadcast %25 : f32 to vector<8x1xf32>
    %27 = arith.addf %24, %26 : vector<8x1xf32>
    %c0_20 = arith.constant 0 : index
    %c0_21 = arith.constant 0 : index
    %28 = vector.load %arg8[%c0_20, %c0_21] : memref<8x1xf32, #tpu.memory_space<vmem>>, vector<8x1xf32>
    tpu.vector_store %arg8[%c0_20, %c0_21], %27 {strides = array<i32>} : memref<8x1xf32, #tpu.memory_space<vmem>>, vector<8x1xf32>,
    return
  }
  func.func @transform_0(%arg0: i32) -> (i32, i32) {
    %c0_i32 = arith.constant 0 : i32
    %c0_i32_0 = arith.constant 0 : i32
    return %arg0, %c0_i32 : i32, i32
  }
  func.func @transform_1(%arg0: i32) -> (i32, i32) {
    %c0_i32 = arith.constant 0 : i32
    %c0_i32_0 = arith.constant 0 : i32
    return %arg0, %c0_i32 : i32, i32
  }
  func.func @transform_2(%arg0: i32) -> (i32, i32) {
    %c0_i32 = arith.constant 0 : i32
    %c0_i32_0 = arith.constant 0 : i32
    %c0_i32_1 = arith.constant 0 : i32
    return %c0_i32, %c0_i32_0 : i32, i32
  }
  func.func @transform_3(%arg0: i32) -> (i32, i32) {
    %c0_i32 = arith.constant 0 : i32
    %c0_i32_0 = arith.constant 0 : i32
    %c0_i32_1 = arith.constant 0 : i32
    return %c0_i32, %c0_i32_0 : i32, i32
  }
  func.func @transform_4(%arg0: i32) -> (i32, i32) {
    %c0_i32 = arith.constant 0 : i32
    %c0_i32_0 = arith.constant 0 : i32
    %c0_i32_1 = arith.constant 0 : i32
    return %c0_i32, %c0_i32_0 : i32, i32
  }
  func.func @transform_5(%arg0: i32) -> (i32, i32) {
    %c0_i32 = arith.constant 0 : i32
    %c0_i32_0 = arith.constant 0 : i32
    %c0_i32_1 = arith.constant 0 : i32
    return %c0_i32, %c0_i32_0 : i32, i32
  }
  func.func @transform_6(%arg0: i32) -> (i32, i32) {
    %c0_i32 = arith.constant 0 : i32
    %c0_i32_0 = arith.constant 0 : i32
    %c0_i32_1 = arith.constant 0 : i32
    return %c0_i32, %c0_i32_0 : i32, i32
  }
  func.func @transform_7(%arg0: i32) -> (i32, i32) {
    %c0_i32 = arith.constant 0 : i32
    %c0_i32_0 = arith.constant 0 : i32
    return %arg0, %c0_i32 : i32, i32
  }
}

</mosaic_0001>

<llo_original>
// kernel: tpu_custom_call.1
$region0: #{tpu_custom_call.1}
  #allocation0 [shape = 'u32[]', space=smem, size = 0x4, offset = 0x4, fixed_abs, tag = 'smem constant byte address 0x4 - core index']
  #allocation1 [shape = 'u32[72,128]{1,0:T(1,128)}', space=vmem, size = 0x9000, scoped, tag = 'internal scratch']
  #allocation2 [shape = 'f32[1,1]{1,0:T(1,128)S(6)}', space=smem, size = 0x200, scoped, tag = 'scoped memory for tpu_custom_call.1']
  %s0 = inlined_call_operand.hbm [shape: bf16[8,16], index: 0, kind: input, shape index: {}]
  %s1 = inlined_call_operand.hbm [shape: bf16[8,8], index: 1, kind: input, shape index: {}]
  %s2 = inlined_call_operand.hbm [shape: bf16[16,128], index: 2, kind: input, shape index: {}]
  %s3 = inlined_call_operand.vmem [shape: bf16[8,128], index: 3, kind: input, shape index: {}]
  %s4 = inlined_call_operand.hbm [shape: bf16[128,128], index: 4, kind: input, shape index: {}]
  %s5 = inlined_call_operand.hbm [shape: f32[8,128], index: 5, kind: input, shape index: {}]
  %s6 = inlined_call_operand.<no memory space> [shape: f32[1,1], index: 6, kind: input, shape index: {}]
  %s7 = inlined_call_operand.vmem [shape: f32[8,1], index: 7, kind: output, shape index: {}]
  %s8 = sld [smem:[#allocation0]]
  $region58: #{tpu_custom_call.1} parent=0
    _
  %s10 = ssub.s32 1, %s8
  %s11 = scalar_select 0, %s10, %s8
  %12 = sst [smem:[#allocation2]] %s6
  $region1: #{tpu_custom_call.1} parent=0
    #allocation3 [shape = 'u8[2048]{0}', space=vmem, size = 0x800, scoped, tag = 'input window, operand 0, single buffered']
    #allocation4 [shape = 's32[1]{0}', space=sflag, size = 0x4, scoped, tag = 'scoped memory for tpu_custom_call.1']
    #allocation5 [shape = 'u8[2048]{0}', space=vmem, size = 0x800, scoped, tag = 'input window, operand 1, single buffered']
    #allocation6 [shape = 's32[1]{0}', space=sflag, size = 0x4, scoped, tag = 'scoped memory for tpu_custom_call.1']
    #allocation7 [shape = 'u8[4096]{0}', space=vmem, size = 0x1000, scoped, tag = 'input window, operand 2, single buffered']
    #allocation8 [shape = 'u8[32768]{0}', space=vmem, size = 0x8000, scoped, tag = 'input window, operand 4, single buffered']
    #allocation9 [shape = 's32[1]{0}', space=sflag, size = 0x4, scoped, tag = 'scoped memory for tpu_custom_call.1']
    #allocation10 [shape = 'u8[4096]{0}', space=vmem, size = 0x1000, scoped, tag = 'input window, operand 5, single buffered']
    %13 = vsyncpa [#allocation4], 0
    %14 = vsyncpa [#allocation6], 0
    %15 = vsyncpa [#allocation9], 0
    // Predicated region
    $region2: #{tpu_custom_call.1} parent=1 // pred_check
      _
    $region3: #{tpu_custom_call.1} parent=1 // pred_check_branch
      %17 = sbr.rel (0) target = $region5
    $region4: #{tpu_custom_call.1} parent=1 // pred_region
      %19 = vsyncadd [#allocation4], 0
      %s21 = sshll.u32 %s0, 4
      %s22 = int_to_ptr.hbm [resolvable:$true] %s21
      %s23 = sshll.u32 [#allocation3], 4
      %s24 = int_to_ptr.vmem [resolvable:$true] %s23
      %26 = dma.hbm_to_vmem [thread:$0]  %s22, 64, %s24, [#allocation4]
    $region5: #{tpu_custom_call.1} parent=1 // pred_fallthru
      _
    // Predicated region
    $region6: #{tpu_custom_call.1} parent=1 // pred_check
      _
    $region7: #{tpu_custom_call.1} parent=1 // pred_check_branch
      %28 = sbr.rel (0) target = $region9
    $region8: #{tpu_custom_call.1} parent=1 // pred_region
      %30 = vsyncadd [#allocation6], 0
      %s32 = sshll.u32 %s1, 4
      %s33 = int_to_ptr.hbm [resolvable:$true] %s32
      %s34 = sshll.u32 [#allocation5], 4
      %s35 = int_to_ptr.vmem [resolvable:$true] %s34
      %37 = dma.hbm_to_vmem [thread:$0]  %s33, 64, %s35, [#allocation6]
    $region9: #{tpu_custom_call.1} parent=1 // pred_fallthru
      _
    // Predicated region
    $region10: #{tpu_custom_call.1} parent=1 // pred_check
      _
    $region11: #{tpu_custom_call.1} parent=1 // pred_check_branch
      %39 = sbr.rel (0) target = $region13
    $region12: #{tpu_custom_call.1} parent=1 // pred_region
      %41 = vsyncadd [#allocation6], 0
      %s42 = sshll.u32 %s2, 4
      %s43 = int_to_ptr.hbm [resolvable:$true] %s42
      %s44 = sshll.u32 [#allocation7], 4
      %s45 = int_to_ptr.vmem [resolvable:$true] %s44
      %50 = dma.hbm_to_vmem [thread:$0]  %s43, 128, %s45, [#allocation6], 64, 64, 4
    $region13: #{tpu_custom_call.1} parent=1 // pred_fallthru
      _
    // Predicated region
    $region14: #{tpu_custom_call.1} parent=1 // pred_check
      _
    $region15: #{tpu_custom_call.1} parent=1 // pred_check_branch
      %52 = sbr.rel (0) target = $region17
    $region16: #{tpu_custom_call.1} parent=1 // pred_region
      _
    $region17: #{tpu_custom_call.1} parent=1 // pred_fallthru
      _
    // Predicated region
    $region18: #{tpu_custom_call.1} parent=1 // pred_check
      _
    $region19: #{tpu_custom_call.1} parent=1 // pred_check_branch
      %54 = sbr.rel (0) target = $region21
    $region20: #{tpu_custom_call.1} parent=1 // pred_region
      %56 = vsyncadd [#allocation9], 0
      %s57 = sshll.u32 %s4, 4
      %s58 = int_to_ptr.hbm [resolvable:$true] %s57
      %s59 = sshll.u32 [#allocation8], 4
      %s60 = int_to_ptr.vmem [resolvable:$true] %s59
      %65 = dma.hbm_to_vmem [thread:$0]  %s58, 1024, %s60, [#allocation9], 64, 64, 4
    $region21: #{tpu_custom_call.1} parent=1 // pred_fallthru
      _
    // Predicated region
    $region22: #{tpu_custom_call.1} parent=1 // pred_check
      _
    $region23: #{tpu_custom_call.1} parent=1 // pred_check_branch
      %67 = sbr.rel (0) target = $region25
    $region24: #{tpu_custom_call.1} parent=1 // pred_region
      %69 = vsyncadd [#allocation9], 0
      %s71 = sshll.u32 %s5, 4
      %s72 = int_to_ptr.hbm [resolvable:$true] %s71
      %s73 = sshll.u32 [#allocation10], 4
      %s74 = int_to_ptr.vmem [resolvable:$true] %s73
      %76 = dma.hbm_to_vmem [thread:$0]  %s72, 128, %s74, [#allocation9]
    $region25: #{tpu_custom_call.1} parent=1 // pred_fallthru
      _
    // Predicated region
    $region26: #{tpu_custom_call.1} parent=1 // pred_check
      _
    $region27: #{tpu_custom_call.1} parent=1 // pred_check_branch
      %78 = sbr.rel (0) target = $region29
    $region28: #{tpu_custom_call.1} parent=1 // pred_region
      _
    $region29: #{tpu_custom_call.1} parent=1 // pred_fallthru
      _
    // Predicated region
    $region30: #{tpu_custom_call.1} parent=1 // pred_check
      _
    $region31: #{tpu_custom_call.1} parent=1 // pred_check_branch
      %80 = sbr.rel (0) target = $region33
    $region32: #{tpu_custom_call.1} parent=1 // pred_region
      %82 = dma.done [#allocation4], 64
    $region33: #{tpu_custom_call.1} parent=1 // pred_fallthru
      _
    // Predicated region
    $region34: #{tpu_custom_call.1} parent=1 // pred_check
      _
    $region35: #{tpu_custom_call.1} parent=1 // pred_check_branch
      %84 = sbr.rel (0) target = $region37
    $region36: #{tpu_custom_call.1} parent=1 // pred_region
      %86 = dma.done [#allocation6], 64
    $region37: #{tpu_custom_call.1} parent=1 // pred_fallthru
      _
    // Predicated region
    $region38: #{tpu_custom_call.1} parent=1 // pred_check
      _
    $region39: #{tpu_custom_call.1} parent=1 // pred_check_branch
      %88 = sbr.rel (0) target = $region41
    $region40: #{tpu_custom_call.1} parent=1 // pred_region
      %90 = dma.done [#allocation6], 128
    $region41: #{tpu_custom_call.1} parent=1 // pred_fallthru
      _
    // Predicated region
    $region42: #{tpu_custom_call.1} parent=1 // pred_check
      _
    $region43: #{tpu_custom_call.1} parent=1 // pred_check_branch
      %92 = sbr.rel (0) target = $region45
    $region44: #{tpu_custom_call.1} parent=1 // pred_region
      %94 = dma.done [#allocation9], 1024
    $region45: #{tpu_custom_call.1} parent=1 // pred_fallthru
      _
    // Predicated region
    $region46: #{tpu_custom_call.1} parent=1 // pred_check
      _
    $region47: #{tpu_custom_call.1} parent=1 // pred_check_branch
      %96 = sbr.rel (0) target = $region49
    $region48: #{tpu_custom_call.1} parent=1 // pred_region
      %98 = dma.done [#allocation9], 128
    $region49: #{tpu_custom_call.1} parent=1 // pred_fallthru
      _
    %v100 = vld [vmem:[#allocation3] sm:$0xf]
    %v101 = vld [vmem:[#allocation7] sm:$0xf]
    %v102 = vld [vmem:[#allocation7 + $0x4] sm:$0xf]
    %v103 = vld [vmem:[#allocation5] sm:$0xf]
    %v104 = vld [vmem:[%s3] sm:$0xf]
    %vm105 = vcmask 64512
    %v107 = vsel %vm105, %v103, 0
    %vm109 = vcmask 1043456
    %v111 = vsel %vm109, %v104, 0
    %113 = vmatpush.bf16.msra.mxu0 0
    %114 = vmatpush.bf16.msra.mxu0 0
    %115 = vmatpush.bf16.msra.mxu0 0
    %116 = vmatpush.bf16.msra.mxu0 0
    %117 = vmatpush.bf16.msra.mxu0 0
    %118 = vmatpush.bf16.msra.mxu0 0
    %119 = vmatpush.bf16.msra.mxu0 0
    %120 = vmatpush.bf16.msra.mxu0 %v111
    %121 = vmatmul.bf16.gmra.mxu0 %v107
    %v122 = vpop.f32.mrf.mxu0
    %v123 = vadd.f32 0.0, %v122
    %v124 = vpop.f32.mrf.mxu0
    %125 = vdwg.mxu0
    %v128 = vunpack.c.l.b16 %v101
    %v129 = vunpack.c.l.b16 %v102
    %v130 = vpack.c.b16 %v129, %v128
    %vm132 = vcmask 130048
    %v134 = vsel %vm132, %v100, 0
    %136 = vmatpush.bf16.msra.mxu0 0
    %137 = vmatpush.bf16.msra.mxu0 0
    %138 = vmatpush.bf16.msra.mxu0 0
    %139 = vmatpush.bf16.msra.mxu0 0
    %140 = vmatpush.bf16.msra.mxu0 0
    %141 = vmatpush.bf16.msra.mxu0 0
    %142 = vmatpush.bf16.msra.mxu0 0
    %143 = vmatpush.bf16.msra.mxu0 %v130
    %144 = vmatmul.bf16.gmra.mxu0 %v134
    %v145 = vpop.f32.mrf.mxu0
    %v146 = vadd.f32 %v123, %v145
    %v147 = vpop.f32.mrf.mxu0
    %148 = vdwg.mxu0
    %v149 = vld [vmem:[#allocation10] sm:$0x1]
    %v150 = vperm.slane %v149, 0
    %v151 = vadd.f32 %v146, %v150
    %v152 = vmax.f32 %v151, 0.0
    %v153 = vpack.c.bf16 %v152, %v152
    %v154 = vld [vmem:[#allocation8] sm:$0xf]
    %v155 = vld [vmem:[#allocation8 + $0x4] sm:$0xf]
    %v156 = vld [vmem:[#allocation8 + $0x8] sm:$0xf]
    %v157 = vld [vmem:[#allocation8 + $0xc] sm:$0xf]
    %v158 = vld [vmem:[#allocation8 + $0x10] sm:$0xf]
    %v159 = vld [vmem:[#allocation8 + $0x14] sm:$0xf]
    %v160 = vld [vmem:[#allocation8 + $0x18] sm:$0xf]
    %v161 = vld [vmem:[#allocation8 + $0x1c] sm:$0xf]
    %v162 = vld [vmem:[#allocation8 + $0x20] sm:$0xf]
    %v163 = vld [vmem:[#allocation8 + $0x24] sm:$0xf]
    %v164 = vld [vmem:[#allocation8 + $0x28] sm:$0xf]
    %v165 = vld [vmem:[#allocation8 + $0x2c] sm:$0xf]
    %v166 = vld [vmem:[#allocation8 + $0x30] sm:$0xf]
    %v167 = vld [vmem:[#allocation8 + $0x34] sm:$0xf]
    %v168 = vld [vmem:[#allocation8 + $0x38] sm:$0xf]
    %v169 = vld [vmem:[#allocation8 + $0x3c] sm:$0xf]
    %v170 = vld [vmem:[#allocation10 + $0x1] sm:$0x1]
    %v171 = vperm.slane %v170, 0
    %v188 = vunpack.c.l.b16 %v154
    %v189 = vunpack.c.l.b16 %v155
    %v190 = vunpack.c.l.b16 %v156
    %v191 = vunpack.c.l.b16 %v157
    %v192 = vunpack.c.l.b16 %v158
    %v193 = vunpack.c.l.b16 %v159
    %v194 = vunpack.c.l.b16 %v160
    %v195 = vunpack.c.l.b16 %v161
    %v196 = vunpack.c.l.b16 %v162
    %v197 = vunpack.c.l.b16 %v163
    %v198 = vunpack.c.l.b16 %v164
    %v199 = vunpack.c.l.b16 %v165
    %v200 = vunpack.c.l.b16 %v166
    %v201 = vunpack.c.l.b16 %v167
    %v202 = vunpack.c.l.b16 %v168
    %v203 = vunpack.c.l.b16 %v169
    %v204 = vpack.c.b16 %v189, %v188
    %v205 = vpack.c.b16 %v191, %v190
    %v206 = vpack.c.b16 %v193, %v192
    %v207 = vpack.c.b16 %v195, %v194
    %v208 = vpack.c.b16 %v197, %v196
    %v209 = vpack.c.b16 %v199, %v198
    %v210 = vpack.c.b16 %v201, %v200
    %v211 = vpack.c.b16 %v203, %v202
    %220 = vmatpush.bf16.msra.mxu0 %v211
    %221 = vmatpush.bf16.msra.mxu0 %v210
    %222 = vmatpush.bf16.msra.mxu0 %v209
    %223 = vmatpush.bf16.msra.mxu0 %v208
    %224 = vmatpush.bf16.msra.mxu0 %v207
    %225 = vmatpush.bf16.msra.mxu0 %v206
    %226 = vmatpush.bf16.msra.mxu0 %v205
    %227 = vmatpush.bf16.msra.mxu0 %v204
    %228 = vmatmul.bf16.gmra.mxu0 %v153
    %v229 = vpop.f32.mrf.mxu0
    %v230 = vadd.f32 %v171, %v229
    %v231 = vpop.f32.mrf.mxu0
    %232 = vdwg.mxu0
    %v233 = vmax.f32 %v230, 0.0
    %v234 = vld [vmem:[#allocation10 + $0x2] sm:$0x1]
    %v235 = vperm.slane %v234, 0
    %v236 = vmul.f32 %v233, %v235
    %237 = vadd.xlane.f32.xlu0 %v236
    %v238 = vpop.xlane.xlu0 %237
    %s239 = sld [smem:[#allocation2]]
    %v240 = vstv %s239
    %v241 = vadd.f32 %v238, %v240
    %vm242 = vcmask 7168
    %243 = vst.msk [vmem:[%s7] sm:$0xff] %vm242, %v241
    // Predicated region
    $region50: #{tpu_custom_call.1} parent=1 // pred_check
      _
    $region51: #{tpu_custom_call.1} parent=1 // pred_check_branch
      %245 = sbr.rel (0) target = $region53
    $region52: #{tpu_custom_call.1} parent=1 // pred_region
      _
    $region53: #{tpu_custom_call.1} parent=1 // pred_fallthru
      _
    // Predicated region
    $region54: #{tpu_custom_call.1} parent=1 // pred_check
      _
    $region55: #{tpu_custom_call.1} parent=1 // pred_check_branch
      %247 = sbr.rel (0) target = $region57
    $region56: #{tpu_custom_call.1} parent=1 // pred_region
      _
    $region57: #{tpu_custom_call.1} parent=1 // pred_fallthru
      _
    %248 = vsyncpa [#allocation4], 1
    %249 = vsyncpa [#allocation6], 1
    %250 = vsyncpa [#allocation9], 1

</llo_original>
